<compile_context>
chip_gen: v6e
topology: v6e:2x2x1
jax: 0.10.0
libtpu: 0.0.40
codegen_flags: <defaults>
</compile_context>

<pallas_src>
import functools
import math

import jax
import jax.numpy as jnp
from jax.experimental import pallas as pl
from jax.experimental.pallas import tpu as pltpu

_INV_SQRT2 = 1.0 / math.sqrt(2.0)


def _round_up(n, m):
    return ((n + m - 1) // m) * m


def _choose_tb(batch, block_b):
    """Adaptive batch tile.

    Aim for ~8 grid steps on large batches (pipeline depth + megacore split),
    never below 2048 rows/tile (amortizes ~0.35 us/step overhead) and never
    above `block_b` (VMEM: ~2 KiB/row double-buffered once x's 128-lane
    padding is counted, so block_b=8192 -> ~16 MiB < 32 MiB scoped limit).
    """
    b_pad8 = _round_up(batch, 8)
    tb = _round_up(pl.cdiv(batch, 8), 8)
    tb = max(min(tb, block_b), 2048)
    return min(tb, b_pad8)


def mlp_kernel(x_ref, w1_ref, b1_ref, w2_ref, b2_ref, o_ref, *,
               approximate_gelu, layer1_on_mxu):
    x = x_ref[...].astype(jnp.float32)                 # (TB, 4)
    d_in = x_ref.shape[1]

    # --- Layer 1: (TB, 4) @ (4, 64) + b1 ---
    if layer1_on_mxu:
        # Opt-in (v7x): MXU is idle for layer 1; frees ~2*d_in VPU ops/element.
        h = jnp.dot(x, w1_ref[...].astype(jnp.float32),
                    preferred_element_type=jnp.float32)
    else:
        # Default: K=4 contraction as VPU broadcast FMAs (skip the MXU).
        h = x[:, 0:1] * w1_ref[0:1, :]                 # (TB,1)*(1,64) -> (TB,64)
        for k in range(1, d_in):                       # unrolled at trace time
            h = h + x[:, k:k + 1] * w1_ref[k:k + 1, :]
    h = h + b1_ref[...]                                # (1, 64) broadcast add

    # --- GELU ---
    if approximate_gelu:
        # Opt-in: tanh approximation -> transcendental on the EUP slot.
        h = jax.nn.gelu(h, approximate=True)
    else:
        # Default: exact erf GELU, matches torch.nn.GELU() numerics.
        h = 0.5 * h * (1.0 + jax.lax.erf(h * _INV_SQRT2))

    # --- Layer 2: (TB, 64) @ (64, 128) on the MXU, f32 accumulate. ---
    out = jnp.dot(h.astype(w2_ref.dtype), w2_ref[...],
                  preferred_element_type=jnp.float32) + b2_ref[...]
    o_ref[...] = out.astype(o_ref.dtype)               # lane-dense 128-wide store


def mlp_forward(x, w1, b1, w2, b2, *, block_b=8192, approximate_gelu=False,
                layer1_on_mxu=False, out_dtype=None):
    """Fused MLP forward. Batch-tiled; weights pinned in VMEM across the grid."""
    B, d_in = x.shape
    d_out = w2.shape[1]
    out_dtype = x.dtype if out_dtype is None else out_dtype

    tb = _choose_tb(B, block_b)
    b_pad = _round_up(B, tb)
    if b_pad != B:
        x = jnp.pad(x, ((0, b_pad - B), (0, 0)))

    kernel = functools.partial(mlp_kernel,
                               approximate_gelu=approximate_gelu,
                               layer1_on_mxu=layer1_on_mxu)

    out = pl.pallas_call(
        kernel,
        out_shape=jax.ShapeDtypeStruct((b_pad, d_out), out_dtype),
        grid=(b_pad // tb,),
        in_specs=[
            pl.BlockSpec((tb, d_in), lambda i: (i, 0)),   # x: batch-tiled
            pl.BlockSpec(w1.shape, lambda i: (0, 0)),     # weights resident
            pl.BlockSpec(b1.shape, lambda i: (0, 0)),
            pl.BlockSpec(w2.shape, lambda i: (0, 0)),
            pl.BlockSpec(b2.shape, lambda i: (0, 0)),
        ],
        out_specs=pl.BlockSpec((tb, d_out), lambda i: (i, 0)),
        compiler_params=pltpu.CompilerParams(
            dimension_semantics=("parallel",),
            # 32 MiB: covers tb=8192 (~16 MiB double-buffered x+out) on every
            # generation; required explicitly on v5e (16 MiB default), within
            # v7x's 32 MiB scoped default / 64 MiB physical per-TC.
            vmem_limit_bytes=32 << 20),
    )(x, w1, b1, w2, b2)

    return out[:B] if b_pad != B else out


def init_params(key, layers=(4, 64, 128), dtype=jnp.float32):
    """Deterministic init mimicking nn.Linear default: U(-1/sqrt(fan_in), +)."""
    params = []
    for i in range(len(layers) - 1):
        fan_in, fan_out = layers[i], layers[i + 1]
        key, kw, kb = jax.random.split(key, 3)
        bound = 1.0 / math.sqrt(fan_in)
        # Stored as (in, out) so the kernel does x @ W (== x @ W_torch.T).
        w = jax.random.uniform(kw, (fan_in, fan_out), dtype,
                               minval=-bound, maxval=bound)
        b = jax.random.uniform(kb, (1, fan_out), dtype,
                               minval=-bound, maxval=bound)
        params.append((w, b))
    return params


def _reference(x, w1, b1, w2, b2):
    h = x @ w1 + b1
    h = 0.5 * h * (1.0 + jax.lax.erf(h / math.sqrt(2.0)))
    return h @ w2 + b2


if __name__ == "__main__":
    key = jax.random.PRNGKey(0)
    layers = (4, 64, 128)

    (w1, b1), (w2, b2) = init_params(key, layers)
    num_params = sum(int(w.size) + int(b.size) for (w, b) in [(w1, b1), (w2, b2)])
    assert num_params == 4 * 64 + 64 + 64 * 128 + 128  # 8640 params, as in torch

    # Small-batch check (single grid step, padded partial tile).
    key, kx = jax.random.split(key)
    B_small = 8
    x_small = jax.random.normal(kx, (B_small, layers[0]), jnp.float32)
    out_small = jax.block_until_ready(mlp_forward(x_small, w1, b1, w2, b2))
    ref_small = _reference(x_small, w1, b1, w2, b2)
    assert out_small.shape == (B_small, layers[-1])
    assert jnp.allclose(out_small, ref_small, atol=1e-5, rtol=1e-5)

    # Larger-batch check exercising the batch-tiled, pipelined path
    # (tb=2048 -> grid=(2,), partial-tile-free, megacore-splittable).
    key, kx2 = jax.random.split(key)
    B_big = 4096
    x_big = jax.random.normal(kx2, (B_big, layers[0]), jnp.float32)
    out_big = jax.block_until_ready(mlp_forward(x_big, w1, b1, w2, b2))
    ref_big = _reference(x_big, w1, b1, w2, b2)
    assert out_big.shape == (B_big, layers[-1])
    assert jnp.allclose(out_big, ref_big, atol=1e-5, rtol=1e-5)

    print("KERNEL_OK")
</pallas_src>

<mosaic_0001>
module attributes {stable_mosaic.version = 11 : i64} {
  func.func @mlp_kernel(%arg0: i32, %arg1: memref<8x4xf32, #tpu.memory_space<vmem>>, %arg2: memref<4x64xf32, #tpu.memory_space<vmem>>, %arg3: memref<1x64xf32, #tpu.memory_space<vmem>>, %arg4: memref<64x128xf32, #tpu.memory_space<vmem>>, %arg5: memref<1x128xf32, #tpu.memory_space<vmem>>, %arg6: memref<8x128xf32, #tpu.memory_space<vmem>>) attributes {dimension_semantics = [#tpu.dimension_semantics<parallel>], iteration_bounds = array<i64: 1>, scalar_prefetch = 0 : i64, scratch_operands = 0 : i64, tpu.core_type = #tpu.core_type<tc>, window_params = [{transform_indices = @transform_0, window_bounds = array<i64: 8, 4>}, {pipeline_mode = #tpu.pipeline_mode<synchronous>, transform_indices = @transform_1, window_bounds = array<i64: 4, 64>}, {pipeline_mode = #tpu.pipeline_mode<synchronous>, transform_indices = @transform_2, window_bounds = array<i64: 1, 64>}, {pipeline_mode = #tpu.pipeline_mode<synchronous>, transform_indices = @transform_3, window_bounds = array<i64: 64, 128>}, {pipeline_mode = #tpu.pipeline_mode<synchronous>, transform_indices = @transform_4, window_bounds = array<i64: 1, 128>}, {transform_indices = @transform_5, window_bounds = array<i64: 8, 128>}]} {
    %c0 = arith.constant 0 : index
    %c0_0 = arith.constant 0 : index
    %0 = vector.load %arg1[%c0, %c0_0] : memref<8x4xf32, #tpu.memory_space<vmem>>, vector<8x4xf32>
    %1 = vector.extract_strided_slice %0 {offsets = [0, 0], sizes = [8, 1], strides = [1, 1]} : vector<8x4xf32> to vector<8x1xf32>
    %c0_1 = arith.constant 0 : index
    %c0_2 = arith.constant 0 : index
    %2 = vector.load %arg2[%c0_1, %c0_2] : memref<4x64xf32, #tpu.memory_space<vmem>>, vector<1x64xf32>
    %3 = vector.broadcast %1 : vector<8x1xf32> to vector<8x64xf32>
    %4 = vector.broadcast %2 : vector<1x64xf32> to vector<8x64xf32>
    %5 = arith.mulf %3, %4 : vector<8x64xf32>
    %6 = vector.extract_strided_slice %0 {offsets = [0, 1], sizes = [8, 1], strides = [1, 1]} : vector<8x4xf32> to vector<8x1xf32>
    %c1 = arith.constant 1 : index
    %c0_3 = arith.constant 0 : index
    %7 = vector.load %arg2[%c1, %c0_3] : memref<4x64xf32, #tpu.memory_space<vmem>>, vector<1x64xf32>
    %8 = vector.broadcast %6 : vector<8x1xf32> to vector<8x64xf32>
    %9 = vector.broadcast %7 : vector<1x64xf32> to vector<8x64xf32>
    %10 = arith.mulf %8, %9 : vector<8x64xf32>
    %11 = arith.addf %5, %10 : vector<8x64xf32>
    %12 = vector.extract_strided_slice %0 {offsets = [0, 2], sizes = [8, 1], strides = [1, 1]} : vector<8x4xf32> to vector<8x1xf32>
    %c2 = arith.constant 2 : index
    %c0_4 = arith.constant 0 : index
    %13 = vector.load %arg2[%c2, %c0_4] : memref<4x64xf32, #tpu.memory_space<vmem>>, vector<1x64xf32>
    %14 = vector.broadcast %12 : vector<8x1xf32> to vector<8x64xf32>
    %15 = vector.broadcast %13 : vector<1x64xf32> to vector<8x64xf32>
    %16 = arith.mulf %14, %15 : vector<8x64xf32>
    %17 = arith.addf %11, %16 : vector<8x64xf32>
    %18 = vector.extract_strided_slice %0 {offsets = [0, 3], sizes = [8, 1], strides = [1, 1]} : vector<8x4xf32> to vector<8x1xf32>
    %c3 = arith.constant 3 : index
    %c0_5 = arith.constant 0 : index
    %19 = vector.load %arg2[%c3, %c0_5] : memref<4x64xf32, #tpu.memory_space<vmem>>, vector<1x64xf32>
    %20 = vector.broadcast %18 : vector<8x1xf32> to vector<8x64xf32>
    %21 = vector.broadcast %19 : vector<1x64xf32> to vector<8x64xf32>
    %22 = arith.mulf %20, %21 : vector<8x64xf32>
    %23 = arith.addf %17, %22 : vector<8x64xf32>
    %c0_6 = arith.constant 0 : index
    %c0_7 = arith.constant 0 : index
    %24 = vector.load %arg3[%c0_6, %c0_7] : memref<1x64xf32, #tpu.memory_space<vmem>>, vector<1x64xf32>
    %25 = vector.broadcast %24 : vector<1x64xf32> to vector<8x64xf32>
    %26 = arith.addf %23, %25 : vector<8x64xf32>
    %cst = arith.constant 5.000000e-01 : f32
    %27 = vector.broadcast %cst : f32 to vector<8x64xf32>
    %28 = arith.mulf %27, %26 : vector<8x64xf32>
    %cst_8 = arith.constant 0.707106769 : f32
    %29 = vector.broadcast %cst_8 : f32 to vector<8x64xf32>
    %30 = arith.mulf %26, %29 : vector<8x64xf32>
    %31 = math.erf %30 : vector<8x64xf32>
    %cst_9 = arith.constant 1.000000e+00 : f32
    %32 = vector.broadcast %cst_9 : f32 to vector<8x64xf32>
    %33 = arith.addf %32, %31 : vector<8x64xf32>
    %34 = arith.mulf %28, %33 : vector<8x64xf32>
    %c0_10 = arith.constant 0 : index
    %c0_11 = arith.constant 0 : index
    %35 = vector.load %arg4[%c0_10, %c0_11] : memref<64x128xf32, #tpu.memory_space<vmem>>, vector<64x128xf32>
    %cst_12 = arith.constant dense<0.000000e+00> : vector<8x128xf32>
    %36 = tpu.matmul %34, %35, %cst_12 {dimension_numbers = #tpu.dot_dimension_numbers<[1], [0], [0], [1], [0, 0, 1, 1], [], []>} : vector<8x64xf32>, vector<64x128xf32>, vector<8x128xf32> -> vector<8x128xf32>
    %c0_13 = arith.constant 0 : index
    %c0_14 = arith.constant 0 : index
    %37 = vector.load %arg5[%c0_13, %c0_14] : memref<1x128xf32, #tpu.memory_space<vmem>>, vector<1x128xf32>
    %38 = vector.broadcast %37 : vector<1x128xf32> to vector<8x128xf32>
    %39 = arith.addf %36, %38 : vector<8x128xf32>
    %c0_15 = arith.constant 0 : index
    %c0_16 = arith.constant 0 : index
    %40 = vector.load %arg6[%c0_15, %c0_16] : memref<8x128xf32, #tpu.memory_space<vmem>>, vector<8x128xf32>
    tpu.vector_store %arg6[%c0_15, %c0_16], %39 {strides = array<i32>} : memref<8x128xf32, #tpu.memory_space<vmem>>, vector<8x128xf32>,
    return
  }
  func.func @transform_0(%arg0: i32) -> (i32, i32) {
    %c0_i32 = arith.constant 0 : i32
    %c0_i32_0 = arith.constant 0 : i32
    return %arg0, %c0_i32 : i32, i32
  }
  func.func @transform_1(%arg0: i32) -> (i32, i32) {
    %c0_i32 = arith.constant 0 : i32
    %c0_i32_0 = arith.constant 0 : i32
    %c0_i32_1 = arith.constant 0 : i32
    return %c0_i32, %c0_i32_0 : i32, i32
  }
  func.func @transform_2(%arg0: i32) -> (i32, i32) {
    %c0_i32 = arith.constant 0 : i32
    %c0_i32_0 = arith.constant 0 : i32
    %c0_i32_1 = arith.constant 0 : i32
    return %c0_i32, %c0_i32_0 : i32, i32
  }
  func.func @transform_3(%arg0: i32) -> (i32, i32) {
    %c0_i32 = arith.constant 0 : i32
    %c0_i32_0 = arith.constant 0 : i32
    %c0_i32_1 = arith.constant 0 : i32
    return %c0_i32, %c0_i32_0 : i32, i32
  }
  func.func @transform_4(%arg0: i32) -> (i32, i32) {
    %c0_i32 = arith.constant 0 : i32
    %c0_i32_0 = arith.constant 0 : i32
    %c0_i32_1 = arith.constant 0 : i32
    return %c0_i32, %c0_i32_0 : i32, i32
  }
  func.func @transform_5(%arg0: i32) -> (i32, i32) {
    %c0_i32 = arith.constant 0 : i32
    %c0_i32_0 = arith.constant 0 : i32
    return %arg0, %c0_i32 : i32, i32
  }
}

</mosaic_0001>

<llo_original>
// kernel: tpu_custom_call.1
$region0: #{tpu_custom_call.1}
  #allocation0 [shape = 'u32[]', space=smem, size = 0x4, offset = 0x4, fixed_abs, tag = 'smem constant byte address 0x4 - core index']
  #allocation1 [shape = 'u32[144,128]{1,0:T(1,128)}', space=vmem, size = 0x12000, scoped, tag = 'internal scratch']
  %s0 = inlined_call_operand.vmem [shape: f32[8,4], index: 0, kind: input, shape index: {}]
  %s1 = inlined_call_operand.vmem [shape: f32[4,64], index: 1, kind: input, shape index: {}]
  %s2 = inlined_call_operand.vmem [shape: f32[1,64], index: 2, kind: input, shape index: {}]
  %s3 = inlined_call_operand.hbm [shape: f32[64,128], index: 3, kind: input, shape index: {}]
  %s4 = inlined_call_operand.vmem [shape: f32[1,128], index: 4, kind: input, shape index: {}]
  %s5 = inlined_call_operand.hbm [shape: f32[8,128], index: 5, kind: output, shape index: {}]
  %s6 = sld [smem:[#allocation0]]
  $region34: #{tpu_custom_call.1} parent=0
    _
  %s8 = ssub.s32 1, %s6
  %s9 = scalar_select 0, %s8, %s6
  $region1: #{tpu_custom_call.1} parent=0
    #allocation2 [shape = 'u8[32768]{0}', space=vmem, size = 0x8000, scoped, tag = 'input window, operand 3, single buffered']
    #allocation3 [shape = 's32[1]{0}', space=sflag, size = 0x4, scoped, tag = 'scoped memory for tpu_custom_call.1']
    #allocation4 [shape = 's32[1]{0}', space=sflag, size = 0x4, scoped, tag = 'scoped memory for tpu_custom_call.1']
    #allocation5 [shape = 'u8[4096]{0}', space=vmem, size = 0x1000, scoped, tag = 'output window, operand 0, single buffered']
    %10 = vsyncpa [#allocation3], 0
    %11 = vsyncpa [#allocation4], 0
    // Predicated region
    $region2: #{tpu_custom_call.1} parent=1 // pred_check
      _
    $region3: #{tpu_custom_call.1} parent=1 // pred_check_branch
      %13 = sbr.rel (0) target = $region5
    $region4: #{tpu_custom_call.1} parent=1 // pred_region
      _
    $region5: #{tpu_custom_call.1} parent=1 // pred_fallthru
      _
    // Predicated region
    $region6: #{tpu_custom_call.1} parent=1 // pred_check
      _
    $region7: #{tpu_custom_call.1} parent=1 // pred_check_branch
      %15 = sbr.rel (0) target = $region9
    $region8: #{tpu_custom_call.1} parent=1 // pred_region
      _
    $region9: #{tpu_custom_call.1} parent=1 // pred_fallthru
      _
    // Predicated region
    $region10: #{tpu_custom_call.1} parent=1 // pred_check
      _
    $region11: #{tpu_custom_call.1} parent=1 // pred_check_branch
      %17 = sbr.rel (0) target = $region13
    $region12: #{tpu_custom_call.1} parent=1 // pred_region
      _
    $region13: #{tpu_custom_call.1} parent=1 // pred_fallthru
      _
    // Predicated region
    $region14: #{tpu_custom_call.1} parent=1 // pred_check
      _
    $region15: #{tpu_custom_call.1} parent=1 // pred_check_branch
      %19 = sbr.rel (0) target = $region17
    $region16: #{tpu_custom_call.1} parent=1 // pred_region
      %s21 = ssub.s32 1024, 1024
      %22 = vsyncadd [#allocation3], %s21
      %s23 = sshll.u32 [#allocation2], 4
      %s24 = int_to_ptr.vmem [resolvable:$true] %s23
      %29 = dma.hbm_to_vmem [thread:$0]  %s3, 1024, %s24, [#allocation3], 128, 128, 8
    $region17: #{tpu_custom_call.1} parent=1 // pred_fallthru
      _
    // Predicated region
    $region18: #{tpu_custom_call.1} parent=1 // pred_check
      _
    $region19: #{tpu_custom_call.1} parent=1 // pred_check_branch
      %31 = sbr.rel (0) target = $region21
    $region20: #{tpu_custom_call.1} parent=1 // pred_region
      _
    $region21: #{tpu_custom_call.1} parent=1 // pred_fallthru
      _
    // Predicated region
    $region22: #{tpu_custom_call.1} parent=1 // pred_check
      _
    $region23: #{tpu_custom_call.1} parent=1 // pred_check_branch
      %33 = sbr.rel (0) target = $region25
    $region24: #{tpu_custom_call.1} parent=1 // pred_region
      %34 = dma.done [#allocation3], 1024
    $region25: #{tpu_custom_call.1} parent=1 // pred_fallthru
      _
    %v35 = vld [vmem:[%s0] sm:$0xff]
    %v36 = vld [vmem:[%s1] sm:$0x1]
    %38 = vset.pattern.permute.xlu0 0
    %39 = vperm.xlu0 %38, %v35
    %v40 = vpop.permute.xlu0 %39
    %v42 = vlaneseq
    %v43 = vshrl.u32 %v42, 7
    %v44 = vsub.s32 0, %v43
    %v45 = vrot.slane %v36, %v44
    %v46 = vmul.f32 %v40, %v45
    %v47 = vld [vmem:[%s1 + $0x1] sm:$0x1]
    %48 = vset.pattern.permute.xlu0 1
    %49 = vperm.xlu0 %48, %v35
    %v50 = vpop.permute.xlu0 %49
    %v52 = vlaneseq
    %v53 = vshrl.u32 %v52, 7
    %v54 = vsub.s32 0, %v53
    %v55 = vrot.slane %v47, %v54
    %v56 = vmul.f32 %v50, %v55
    %v57 = vadd.f32 %v46, %v56
    %v58 = vld [vmem:[%s1 + $0x2] sm:$0x1]
    %59 = vset.pattern.permute.xlu0 2
    %60 = vperm.xlu0 %59, %v35
    %v61 = vpop.permute.xlu0 %60
    %v63 = vlaneseq
    %v64 = vshrl.u32 %v63, 7
    %v65 = vsub.s32 0, %v64
    %v66 = vrot.slane %v58, %v65
    %v67 = vmul.f32 %v61, %v66
    %v68 = vadd.f32 %v57, %v67
    %v69 = vld [vmem:[%s1 + $0x3] sm:$0x1]
    %70 = vset.pattern.permute.xlu0 3
    %71 = vperm.xlu0 %70, %v35
    %v72 = vpop.permute.xlu0 %71
    %v74 = vlaneseq
    %v75 = vshrl.u32 %v74, 7
    %v76 = vsub.s32 0, %v75
    %v77 = vrot.slane %v69, %v76
    %v78 = vmul.f32 %v72, %v77
    %v79 = vadd.f32 %v68, %v78
    %v80 = vld [vmem:[%s2] sm:$0x1]
    %v82 = vlaneseq
    %v83 = vshrl.u32 %v82, 7
    %v84 = vsub.s32 0, %v83
    %v85 = vrot.slane %v80, %v84
    %v87 = vadd.f32 %v79, %v85
    %v88 = vmul.f32 %v87, 0.5
    %v89 = vmul.f32 %v87, 0.70710677
    %v90 = verf.f32.pop %v89
    %v91 = vadd.f32 %v90, 1.0
    %v92 = vmul.f32 %v88, %v91
    %v93 = vld [vmem:[#allocation2] sm:$0xff]
    %v94 = vld [vmem:[#allocation2 + $0x8] sm:$0xff]
    %v95 = vld [vmem:[#allocation2 + $0x10] sm:$0xff]
    %v96 = vld [vmem:[#allocation2 + $0x18] sm:$0xff]
    %v97 = vld [vmem:[#allocation2 + $0x20] sm:$0xff]
    %v98 = vld [vmem:[#allocation2 + $0x28] sm:$0xff]
    %v99 = vld [vmem:[#allocation2 + $0x30] sm:$0xff]
    %v100 = vld [vmem:[#allocation2 + $0x38] sm:$0xff]
    %v101 = vld [vmem:[%s4] sm:$0x1]
    %v103 = vlaneseq
    %v104 = vshrl.u32 %v103, 7
    %v105 = vsub.s32 0, %v104
    %v106 = vrot.slane %v101, %v105
    %vm108 = vcmask 523264
    %v110 = vsel %vm108, %v92, 0
    %112 = vmatprep.subr.mxu0 0.0
    %113 = vmatpush1.msra.mxu0 0.0
    %114 = vmatprep.subr.mxu0 0.0
    %115 = vmatpush1.msra.mxu0 0.0
    %116 = vmatprep.subr.mxu0 0.0
    %117 = vmatpush1.msra.mxu0 0.0
    %118 = vmatprep.subr.mxu0 0.0
    %119 = vmatpush1.msra.mxu0 0.0
    %120 = vmatprep.subr.mxu0 0.0
    %121 = vmatpush1.msra.mxu0 0.0
    %122 = vmatprep.subr.mxu0 0.0
    %123 = vmatpush1.msra.mxu0 0.0
    %124 = vmatprep.subr.mxu0 0.0
    %125 = vmatpush1.msra.mxu0 0.0
    %126 = vmatprep.subr.mxu0 0.0
    %127 = vmatpush1.msra.mxu0 0.0
    %128 = vmatprep.subr.mxu0 0.0
    %129 = vmatpush1.msra.mxu0 %v100
    %130 = vmatprep.subr.mxu0 0.0
    %131 = vmatpush1.msra.mxu0 %v99
    %132 = vmatprep.subr.mxu0 0.0
    %133 = vmatpush1.msra.mxu0 %v98
    %134 = vmatprep.subr.mxu0 0.0
    %135 = vmatpush1.msra.mxu0 %v97
    %136 = vmatprep.subr.mxu0 0.0
    %137 = vmatpush1.msra.mxu0 %v96
    %138 = vmatprep.subr.mxu0 0.0
    %139 = vmatpush1.msra.mxu0 %v95
    %140 = vmatprep.subr.mxu0 0.0
    %141 = vmatpush1.msra.mxu0 %v94
    %142 = vmatprep.subr.mxu0 0.0
    %143 = vmatpush1.msra.mxu0 %v93
    %144 = vmatprep.subr.mxu0 0.0
    %145 = vmatpush2.msra.mxu0 0.0
    %146 = vmatprep.subr.mxu0 0.0
    %147 = vmatpush2.msra.mxu0 0.0
    %148 = vmatprep.subr.mxu0 0.0
    %149 = vmatpush2.msra.mxu0 0.0
    %150 = vmatprep.subr.mxu0 0.0
    %151 = vmatpush2.msra.mxu0 0.0
    %152 = vmatprep.subr.mxu0 0.0
    %153 = vmatpush2.msra.mxu0 0.0
    %154 = vmatprep.subr.mxu0 0.0
    %155 = vmatpush2.msra.mxu0 0.0
    %156 = vmatprep.subr.mxu0 0.0
    %157 = vmatpush2.msra.mxu0 0.0
    %158 = vmatprep.subr.mxu0 0.0
    %159 = vmatpush2.msra.mxu0 0.0
    %160 = vmatprep.subr.mxu0 0.0
    %161 = vmatpush2.msra.mxu0 0.0
    %162 = vmatprep.subr.mxu0 0.0
    %163 = vmatpush2.msra.mxu0 0.0
    %164 = vmatprep.subr.mxu0 0.0
    %165 = vmatpush2.msra.mxu0 0.0
    %166 = vmatprep.subr.mxu0 0.0
    %167 = vmatpush2.msra.mxu0 0.0
    %168 = vmatprep.subr.mxu0 0.0
    %169 = vmatpush2.msra.mxu0 0.0
    %170 = vmatprep.subr.mxu0 0.0
    %171 = vmatpush2.msra.mxu0 0.0
    %172 = vmatprep.subr.mxu0 0.0
    %173 = vmatpush2.msra.mxu0 0.0
    %174 = vmatprep.subr.mxu0 0.0
    %175 = vmatpush2.msra.mxu0 0.0
    %176 = vmatprep.mubr.f32.mxu0 0.0
    %177 = vmatmul.mubr.f32.gmra.mxu0 %v110
    %v178 = vpop.f32.mrf.mxu0
    %v179 = vadd.f32 %v106, %v178
    %v180 = vpop.f32.mrf.mxu0
    %181 = vdwg.mxu0
    %182 = vst [vmem:[#allocation5] sm:$0xff] %v179
    // Predicated region
    $region26: #{tpu_custom_call.1} parent=1 // pred_check
      _
    $region27: #{tpu_custom_call.1} parent=1 // pred_check_branch
      %184 = sbr.rel (0) target = $region29
    $region28: #{tpu_custom_call.1} parent=1 // pred_region
      %s186 = ssub.s32 128, 128
      %187 = vsyncadd [#allocation4], %s186
      %s189 = sshll.u32 [#allocation5], 4
      %s190 = int_to_ptr.vmem [resolvable:$true] %s189
      %192 = dma.vmem_to_hbm [thread:$0]  %s190, 128, %s5, [#allocation4]
    $region29: #{tpu_custom_call.1} parent=1 // pred_fallthru
      _
    // Predicated region
    $region30: #{tpu_custom_call.1} parent=1 // pred_check
      _
    $region31: #{tpu_custom_call.1} parent=1 // pred_check_branch
      %194 = sbr.rel (0) target = $region33
    $region32: #{tpu_custom_call.1} parent=1 // pred_region
      %195 = dma.done [#allocation4], 128
    $region33: #{tpu_custom_call.1} parent=1 // pred_fallthru
      _
    %196 = vsyncpa [#allocation3], 1
    %197 = vsyncpa [#allocation4], 1

</llo_original>
